<compile_context>
chip_gen: v5e
topology: v5e:2x2
jax: 0.10.0
libtpu: 0.0.40
codegen_flags: <defaults>
</compile_context>

<pallas_src>
import functools

import jax
import jax.numpy as jnp
from jax.experimental import pallas as pl
from jax.experimental.pallas import tpu as pltpu

BN_EPS = 1e-5


def _round_up(x, m):
    return ((x + m - 1) // m) * m


def elasticnet_kernel(p_ref, x_ref, w_ref, o_ref, z_buf, *, valid_b):
    # p_ref: (3,) SMEM (scalar prefetch) = [linear_bias, bn_gamma, bn_beta] (f32)
    # x_ref: (TILE_B, D) VMEM tile of the input (native dtype, pipelined)
    # w_ref: (1, D) VMEM, resident across all grid steps (constant block index)
    # o_ref: (T, TILE_B) VMEM, resident output slab, written once in the last step
    # z_buf: (T, TILE_B) VMEM scratch holding pre-BN linear outputs
    i = pl.program_id(0)
    n_tiles = pl.num_programs(0)

    # Linear: contract feature dim of (1, D) with (TILE_B, D) -> lane-dense (1, TILE_B).
    z = jax.lax.dot_general(
        w_ref[...], x_ref[...],
        dimension_numbers=(((1,), (1,)), ((), ())),
        preferred_element_type=jnp.float32,
    ) + p_ref[0]
    z_buf[pl.ds(i, 1), :] = z

    # Final step: full-batch BatchNorm1d(1) (training-mode stats) + ReLU + store.
    @pl.when(i == n_tiles - 1)
    def _():
        zb = z_buf[...]                                        # (T, L) f32
        _, l = zb.shape
        row = jax.lax.broadcasted_iota(jnp.int32, zb.shape, 0)
        col = jax.lax.broadcasted_iota(jnp.int32, zb.shape, 1)
        valid = (row * l + col) < valid_b                      # mask padded rows
        n = jnp.float32(valid_b)
        mean = jnp.sum(jnp.where(valid, zb, 0.0)) / n
        centered = jnp.where(valid, zb - mean, 0.0)            # centered two-pass var
        var = jnp.sum(centered * centered) / n                 # biased (BN training mode)
        inv_std = jax.lax.rsqrt(var + jnp.float32(BN_EPS))
        y = centered * (inv_std * p_ref[1]) + p_ref[2]
        o_ref[...] = jnp.maximum(y, 0.0).astype(o_ref.dtype)


def elasticnet_forward(x, weight, bias, gamma, beta, *, tile_b=None):
    """x: (B, D); weight: (1, D); bias/gamma/beta: (1,). Returns (B,) f32."""
    B, D = x.shape
    itemsize = jnp.dtype(x.dtype).itemsize

    if tile_b is None:
        if B <= 128:
            # Small batch: cover it exactly (no partial block, no wasted DMA).
            tile_b = _round_up(B, 8)
        else:
            # Keep one x tile <= ~6 MiB so the double-buffered pipeline stays well inside
            # every generation's scoped VMEM (v5e 16 MiB default .. v7x 64 MiB physical).
            rows_by_vmem = max(128, (6 * 1024 * 1024) // max(D * itemsize, 1))
            tile_b = min(1024, rows_by_vmem, _round_up(B, 128))
            tile_b = max(128, (tile_b // 128) * 128)           # lane-dense multiple of 128

    num_tiles = pl.cdiv(B, tile_b)
    w = weight.astype(x.dtype)
    params = jnp.stack([bias[0], gamma[0], beta[0]]).astype(jnp.float32)

    kernel = functools.partial(elasticnet_kernel, valid_b=B)
    out = pl.pallas_call(
        kernel,
        out_shape=jax.ShapeDtypeStruct((num_tiles, tile_b), jnp.float32),
        grid_spec=pltpu.PrefetchScalarGridSpec(
            num_scalar_prefetch=1,
            grid=(num_tiles,),
            in_specs=[
                pl.BlockSpec((tile_b, D), lambda i, p: (i, 0)),   # x: pipelined batch tiles
                pl.BlockSpec((1, D), lambda i, p: (0, 0)),        # w: DMA'd once, resident
            ],
            out_specs=pl.BlockSpec((num_tiles, tile_b), lambda i, p: (0, 0)),
            scratch_shapes=[pltpu.VMEM((num_tiles, tile_b), jnp.float32)],
        ),
        compiler_params=pltpu.CompilerParams(
            # Sequential: full-batch BN stats need every tile before the final store.
            # TODO(synk): on v7x, shard this axis across both TensorCores and combine
            # the BN partial sums via CMEM scratch + core barrier.
            dimension_semantics=("arbitrary",),
            vmem_limit_bytes=32 * 1024 * 1024,
        ),
        cost_estimate=pl.CostEstimate(
            flops=2 * B * D,
            transcendentals=0,
            bytes_accessed=x.size * itemsize + w.size * itemsize + B * 4,
        ),
    )(params, x, w)
    return out.reshape(-1)[:B]


def elasticnet_reg(weight, l1_lambda, l2_lambda):
    # Regularization terms (not part of the forward hot path; plain JAX glue).
    l1 = l1_lambda * jnp.sum(jnp.abs(weight))
    l2 = l2_lambda * jnp.sum(weight * weight)
    return l1 + l2


if __name__ == "__main__":
    B, D = 8, 32  # batch, input_size

    key = jax.random.PRNGKey(0)
    kx, kw, kb = jax.random.split(key, 3)

    # Deterministic parameter init mirroring torch.nn.Linear's U(-1/sqrt(D), 1/sqrt(D)).
    bound = 1.0 / (D ** 0.5)
    weight = jax.random.uniform(kw, (1, D), jnp.float32, -bound, bound)
    bias = jax.random.uniform(kb, (1,), jnp.float32, -bound, bound)
    # BatchNorm1d(1) affine params at their default init.
    gamma = jnp.ones((1,), jnp.float32)
    beta = jnp.zeros((1,), jnp.float32)

    x = jax.random.normal(kx, (B, D), jnp.float32)

    out = jax.block_until_ready(elasticnet_forward(x, weight, bias, gamma, beta))

    # Pure-JAX reference of the same semantics.
    z_ref = x @ weight.T + bias                       # (B, 1)
    mean = jnp.mean(z_ref)
    var = jnp.mean((z_ref - mean) ** 2)               # biased variance (BN training mode)
    y_ref = (z_ref - mean) / jnp.sqrt(var + BN_EPS) * gamma[0] + beta[0]
    ref = jnp.maximum(y_ref, 0.0).reshape(-1)
    assert out.shape == (B,)
    assert jnp.allclose(out, ref, atol=1e-5, rtol=1e-5), (out, ref)

    _ = jax.block_until_ready(elasticnet_reg(weight, 0.01, 0.01))

    print("KERNEL_OK")
</pallas_src>

<mosaic_0001>
module attributes {stable_mosaic.version = 11 : i64} {
  func.func @elasticnet_kernel(%arg0: i32, %arg1: memref<3xf32, #tpu.memory_space<smem>>, %arg2: memref<8x32xf32, #tpu.memory_space<vmem>>, %arg3: memref<1x32xf32, #tpu.memory_space<vmem>>, %arg4: memref<1x8xf32, #tpu.memory_space<vmem>>, %arg5: memref<1x8xf32, #tpu.memory_space<vmem>>) attributes {dimension_semantics = [#tpu.dimension_semantics<arbitrary>], iteration_bounds = array<i64: 1>, scalar_prefetch = 1 : i64, scratch_operands = 1 : i64, tpu.core_type = #tpu.core_type<tc>, window_params = [{transform_indices = @transform_0, window_bounds = array<i64: 8, 32>}, {pipeline_mode = #tpu.pipeline_mode<synchronous>, transform_indices = @transform_1, window_bounds = array<i64: 1, 32>}, {pipeline_mode = #tpu.pipeline_mode<synchronous>, transform_indices = @transform_2, window_bounds = array<i64: 1, 8>}]} {
    %c0 = arith.constant 0 : index
    %c0_0 = arith.constant 0 : index
    %0 = vector.load %arg3[%c0, %c0_0] : memref<1x32xf32, #tpu.memory_space<vmem>>, vector<1x32xf32>
    %c0_1 = arith.constant 0 : index
    %c0_2 = arith.constant 0 : index
    %1 = vector.load %arg2[%c0_1, %c0_2] : memref<8x32xf32, #tpu.memory_space<vmem>>, vector<8x32xf32>
    %cst = arith.constant dense<0.000000e+00> : vector<1x8xf32>
    %2 = tpu.matmul %0, %1, %cst {dimension_numbers = #tpu.dot_dimension_numbers<[1], [1], [0], [0], [0, 0, 1, 0], [], []>} : vector<1x32xf32>, vector<8x32xf32>, vector<1x8xf32> -> vector<1x8xf32>
    %c0_3 = arith.constant 0 : index
    %3 = memref.load %arg1[%c0_3] : memref<3xf32, #tpu.memory_space<smem>>
    %4 = vector.broadcast %3 : f32 to vector<1x8xf32>
    %5 = arith.addf %2, %4 : vector<1x8xf32>
    %6 = arith.index_cast %arg0 : i32 to index
    %c0_4 = arith.constant 0 : index
    %7 = vector.load %arg5[%6, %c0_4] : memref<1x8xf32, #tpu.memory_space<vmem>>, vector<1x8xf32>
    tpu.vector_store %arg5[%6, %c0_4], %5 {strides = array<i32>} : memref<1x8xf32, #tpu.memory_space<vmem>>, vector<1x8xf32>,
    %c0_i32 = arith.constant 0 : i32
    %8 = arith.cmpi eq, %arg0, %c0_i32 : i32
    %9 = arith.extui %8 : i1 to i32
    %c0_i32_5 = arith.constant 0 : i32
    %10 = arith.cmpi ne, %9, %c0_i32_5 : i32
    scf.if %10 {
      %c0_6 = arith.constant 0 : index
      %c0_7 = arith.constant 0 : index
      %11 = vector.load %arg5[%c0_6, %c0_7] : memref<1x8xf32, #tpu.memory_space<vmem>>, vector<1x8xf32>
      %12 = tpu.iota {dimensions = array<i32: 0>} : vector<1x8xi32>
      %13 = tpu.iota {dimensions = array<i32: 1>} : vector<1x8xi32>
      %c8_i32 = arith.constant 8 : i32
      %14 = vector.broadcast %c8_i32 : i32 to vector<1x8xi32>
      %15 = arith.muli %12, %14 : vector<1x8xi32>
      %16 = arith.addi %15, %13 : vector<1x8xi32>
      %c8_i32_8 = arith.constant 8 : i32
      %17 = vector.broadcast %c8_i32_8 : i32 to vector<1x8xi32>
      %18 = arith.cmpi slt, %16, %17 : vector<1x8xi32>
      %cst_9 = arith.constant 0.000000e+00 : f32
      %19 = vector.broadcast %cst_9 : f32 to vector<1x8xf32>
      %20 = arith.select %18, %11, %19 : vector<1x8xi1>, vector<1x8xf32>
      %21 = vector.shape_cast %20 : vector<1x8xf32> to vector<1x1x8xf32>
      %cst_10 = arith.constant dense<0.000000e+00> : vector<1xf32>
      %22 = vector.multi_reduction <add>, %21, %cst_10 [1, 2] : vector<1x1x8xf32> to vector<1xf32>
      %23 = vector.shape_cast %22 : vector<1xf32> to vector<1x1x1xf32>
      %24 = vector.extract %23[0, 0, 0] : f32 from vector<1x1x1xf32>
      %cst_11 = arith.constant 8.000000e+00 : f32
      %25 = arith.divf %24, %cst_11 : f32
      %26 = vector.broadcast %25 : f32 to vector<1x8xf32>
      %27 = arith.subf %11, %26 : vector<1x8xf32>
      %cst_12 = arith.constant 0.000000e+00 : f32
      %28 = vector.broadcast %cst_12 : f32 to vector<1x8xf32>
      %29 = arith.select %18, %27, %28 : vector<1x8xi1>, vector<1x8xf32>
      %30 = arith.mulf %29, %29 : vector<1x8xf32>
      %31 = vector.shape_cast %30 : vector<1x8xf32> to vector<1x1x8xf32>
      %cst_13 = arith.constant dense<0.000000e+00> : vector<1xf32>
      %32 = vector.multi_reduction <add>, %31, %cst_13 [1, 2] : vector<1x1x8xf32> to vector<1xf32>
      %33 = vector.shape_cast %32 : vector<1xf32> to vector<1x1x1xf32>
      %34 = vector.extract %33[0, 0, 0] : f32 from vector<1x1x1xf32>
      %cst_14 = arith.constant 8.000000e+00 : f32
      %35 = arith.divf %34, %cst_14 : f32
      %cst_15 = arith.constant 9.99999974E-6 : f32
      %36 = arith.addf %35, %cst_15 : f32
      %37 = math.rsqrt %36 : f32
      %c1 = arith.constant 1 : index
      %38 = memref.load %arg1[%c1] : memref<3xf32, #tpu.memory_space<smem>>
      %39 = arith.mulf %37, %38 : f32
      %40 = vector.broadcast %39 : f32 to vector<1x8xf32>
      %41 = arith.mulf %29, %40 : vector<1x8xf32>
      %c2 = arith.constant 2 : index
      %42 = memref.load %arg1[%c2] : memref<3xf32, #tpu.memory_space<smem>>
      %43 = vector.broadcast %42 : f32 to vector<1x8xf32>
      %44 = arith.addf %41, %43 : vector<1x8xf32>
      %cst_16 = arith.constant 0.000000e+00 : f32
      %45 = vector.broadcast %cst_16 : f32 to vector<1x8xf32>
      %46 = arith.maximumf %44, %45 : vector<1x8xf32>
      %c0_17 = arith.constant 0 : index
      %c0_18 = arith.constant 0 : index
      %47 = vector.load %arg4[%c0_17, %c0_18] : memref<1x8xf32, #tpu.memory_space<vmem>>, vector<1x8xf32>
      tpu.vector_store %arg4[%c0_17, %c0_18], %46 {strides = array<i32>} : memref<1x8xf32, #tpu.memory_space<vmem>>, vector<1x8xf32>,
    } else {
    }
    return
  }
  func.func @transform_0(%arg0: i32, %arg1: memref<3xf32, #tpu.memory_space<smem>>) -> (i32, i32) {
    %c0_i32 = arith.constant 0 : i32
    %c0_i32_0 = arith.constant 0 : i32
    return %arg0, %c0_i32 : i32, i32
  }
  func.func @transform_1(%arg0: i32, %arg1: memref<3xf32, #tpu.memory_space<smem>>) -> (i32, i32) {
    %c0_i32 = arith.constant 0 : i32
    %c0_i32_0 = arith.constant 0 : i32
    %c0_i32_1 = arith.constant 0 : i32
    return %c0_i32, %c0_i32_0 : i32, i32
  }
  func.func @transform_2(%arg0: i32, %arg1: memref<3xf32, #tpu.memory_space<smem>>) -> (i32, i32) {
    %c0_i32 = arith.constant 0 : i32
    %c0_i32_0 = arith.constant 0 : i32
    %c0_i32_1 = arith.constant 0 : i32
    return %c0_i32, %c0_i32_0 : i32, i32
  }
}

</mosaic_0001>

<llo_original>
// kernel: tpu_custom_call.1
$region0: #{tpu_custom_call.1}
  #allocation0 [shape = 'u32[]', space=smem, size = 0x4, offset = 0x4, fixed_abs, tag = 'smem constant byte address 0x4 - core index']
  #allocation1 [shape = 'u32[72,128]{1,0:T(1,128)}', space=vmem, size = 0x9000, scoped, tag = 'internal scratch']
  #allocation2 [shape = 'f32[1,8]{1,0:T(1,128)}', space=vmem, size = 0x200, scoped, tag = 'scratch operand']
  #allocation3 [shape = 's32[1]{0}', space=sflag, size = 0x4, scoped, tag = 'scoped memory for tpu_custom_call.1']
  #allocation4 [shape = 'u8[512]{0}', space=smem, size = 0x200, scoped, tag = 'prefetched SMEM operand 0']
  %s0 = inlined_call_operand.hbm [shape: f32[3], index: 0, kind: input, shape index: {}]
  %s1 = inlined_call_operand.hbm [shape: f32[8,32], index: 1, kind: input, shape index: {}]
  %s2 = inlined_call_operand.vmem [shape: f32[1,32], index: 2, kind: input, shape index: {}]
  %s3 = inlined_call_operand.hbm [shape: f32[1,8], index: 3, kind: output, shape index: {}]
  %s4 = sld [smem:[#allocation0]]
  $region26: #{tpu_custom_call.1} parent=0
    _
  %s6 = ssub.s32 1, %s4
  %s7 = scalar_select 0, %s6, %s4
  %s9 = sshll.u32 %s0, 4
  %s10 = int_to_ptr.hbm [resolvable:$true] %s9
  %12 = dma.hbm_to_smem %s10, 16, [#allocation4], [#allocation3]
  %14 = dma.done [#allocation3], 16
  %15 = sfence
  $region1: #{tpu_custom_call.1} parent=0
    #allocation5 [shape = 'u8[4096]{0}', space=vmem, size = 0x1000, scoped, tag = 'input window, operand 1, single buffered']
    #allocation6 [shape = 's32[1]{0}', space=sflag, size = 0x4, scoped, tag = 'scoped memory for tpu_custom_call.1']
    #allocation7 [shape = 's32[1]{0}', space=sflag, size = 0x4, scoped, tag = 'scoped memory for tpu_custom_call.1']
    #allocation8 [shape = 'u8[512]{0}', space=vmem, size = 0x400, scoped, tag = 'output window, operand 0, single buffered']
    %16 = vsyncpa [#allocation6], 0
    %17 = vsyncpa [#allocation7], 0
    // Predicated region
    $region2: #{tpu_custom_call.1} parent=1 // pred_check
      _
    $region3: #{tpu_custom_call.1} parent=1 // pred_check_branch
      %19 = sbr.rel (0) target = $region5
    $region4: #{tpu_custom_call.1} parent=1 // pred_region
      %21 = vsyncadd [#allocation6], 0
      %s23 = sshll.u32 %s1, 4
      %s24 = int_to_ptr.hbm [resolvable:$true] %s23
      %s25 = sshll.u32 [#allocation5], 4
      %s26 = int_to_ptr.vmem [resolvable:$true] %s25
      %28 = dma.hbm_to_vmem [thread:$0]  %s24, 128, %s26, [#allocation6]
    $region5: #{tpu_custom_call.1} parent=1 // pred_fallthru
      _
    // Predicated region
    $region6: #{tpu_custom_call.1} parent=1 // pred_check
      _
    $region7: #{tpu_custom_call.1} parent=1 // pred_check_branch
      %30 = sbr.rel (0) target = $region9
    $region8: #{tpu_custom_call.1} parent=1 // pred_region
      _
    $region9: #{tpu_custom_call.1} parent=1 // pred_fallthru
      _
    // Predicated region
    $region10: #{tpu_custom_call.1} parent=1 // pred_check
      _
    $region11: #{tpu_custom_call.1} parent=1 // pred_check_branch
      %32 = sbr.rel (0) target = $region13
    $region12: #{tpu_custom_call.1} parent=1 // pred_region
      %34 = dma.done [#allocation6], 128
    $region13: #{tpu_custom_call.1} parent=1 // pred_fallthru
      _
    %v35 = vld [vmem:[%s2] sm:$0x1]
    %v36 = vld [vmem:[#allocation5] sm:$0xff]
    %s37 = sld [smem:[#allocation4]]
    %v38 = vstv %s37
    %vm39 = vcmask 261120
    %v41 = vsel %vm39, %v35, 0
    %v44 = vsel %vm39, %v36, 0
    %46 = vmatpush.xpose.msra.mxu0 0.0
    %47 = vmatpush.xpose.msra.mxu0 0.0
    %48 = vmatpush.xpose.msra.mxu0 0.0
    %49 = vmatpush.xpose.msra.mxu0 0.0
    %50 = vmatpush.xpose.msra.mxu0 0.0
    %51 = vmatpush.xpose.msra.mxu0 0.0
    %52 = vmatpush.xpose.msra.mxu0 0.0
    %53 = vmatpush.xpose.msra.mxu0 0.0
    %54 = vmatpush.xpose.msra.mxu0 0.0
    %55 = vmatpush.xpose.msra.mxu0 0.0
    %56 = vmatpush.xpose.msra.mxu0 0.0
    %57 = vmatpush.xpose.msra.mxu0 0.0
    %58 = vmatpush.xpose.msra.mxu0 0.0
    %59 = vmatpush.xpose.msra.mxu0 0.0
    %60 = vmatpush.xpose.msra.mxu0 0.0
    %61 = vmatpush.xpose.msra.mxu0 %v44
    %62 = vmatmul.f32.gmra.mxu0 %v41
    %v63 = vpop.f32.mrf.mxu0
    %v64 = vadd.f32 %v38, %v63
    %65 = vdwg.mxu0
    %vm66 = vcmask 57344
    %67 = vst.msk [vmem:[#allocation2] sm:$0x1] %vm66, %v64
    %p68 = scmp.eq.s32.totalorder 0, 0
    // Predicated region
    $region14: #{tpu_custom_call.1} parent=1 // pred_check
      %p69 = pneg %p68
    $region15: #{tpu_custom_call.1} parent=1 // pred_check_branch
      %71 = sbr.rel (%p69) target = $region17
    $region16: #{tpu_custom_call.1} parent=1 // pred_region
      %v72 = vld [vmem:[#allocation2] sm:$0x1]
      %v73 = vlaneseq
      %v74 = vshrl.u32 %v73, 7
      %v75 = vlaneseq
      %v76 = vand.u32 %v75, 127
      %v77 = vmul.u32 %v74, 8
      %v78 = vadd.s32 %v77, %v76
      %vm79 = vcmp.lt.s32.totalorder %v78, 8
      %v80 = vsel %vm79, %v72, 0.0
      %v81 = vsel %vm66, %v80, 0.0
      %82 = vadd.xlane.f32.xlu0 %v81
      %v83 = vpop.xlane.xlu0 %82
      %v84 = vrot.slane %v83, 4
      %v85 = vadd.f32 %v83, %v84
      %v86 = vrot.slane %v85, 2
      %v87 = vadd.f32 %v85, %v86
      %v88 = vrot.slane %v87, 1
      %v89 = vadd.f32 %v87, %v88
      %s90 = vtos %v89
      %v91 = vrcp.pop 8.0
      %v92 = vmul.f32 8.0, %v91
      %v93 = vsub.f32 1.0, %v92
      %v94 = vmul.f32 %v91, %v93
      %v95 = vadd.f32 %v91, %v94
      %vm96 = vweird.f32 %v91
      %v97 = vsel %vm96, %v91, %v95
      %s98 = vtos %v97
      %s99 = smul.f32 %s90, %s98
      %v100 = vstv %s99
      %v101 = vsub.f32 %v72, %v100
      %v102 = vsel %vm79, %v101, 0.0
      %v103 = vmul.f32 %v102, %v102
      %v104 = vsel %vm66, %v103, 0.0
      %105 = vadd.xlane.f32.xlu0 %v104
      %v106 = vpop.xlane.xlu0 %105
      %v107 = vrot.slane %v106, 4
      %v108 = vadd.f32 %v106, %v107
      %v109 = vrot.slane %v108, 2
      %v110 = vadd.f32 %v108, %v109
      %v111 = vrot.slane %v110, 1
      %v112 = vadd.f32 %v110, %v111
      %s113 = vtos %v112
      %v114 = vrcp.pop 8.0
      %v115 = vmul.f32 8.0, %v114
      %v116 = vsub.f32 1.0, %v115
      %v117 = vmul.f32 %v114, %v116
      %v118 = vadd.f32 %v114, %v117
      %vm119 = vweird.f32 %v114
      %v120 = vsel %vm119, %v114, %v118
      %s121 = vtos %v120
      %s122 = smul.f32 %s113, %s121
      %s123 = sadd.f32 %s122, 1e-05
      %v124 = vstv %s123
      %v125 = vrsqrt.pop %v124
      %v126 = vmul.f32 %v125, %v124
      %v127 = vmul.f32 %v126, %v125
      %v128 = vmul.f32 0.5, %v127
      %v129 = vsub.f32 1.5, %v128
      %v130 = vmul.f32 %v125, %v129
      %vm131 = vweird.f32 %v124
      %vm132 = vweird.f32 %v125
      %vm133 = vmor %vm131, %vm132
      %v134 = vsel %vm133, %v125, %v130
      %s135 = vtos %v134
      %s136 = sld [smem:[#allocation4 + $0x1]]
      %s137 = smul.f32 %s135, %s136
      %v138 = vstv %s137
      %v139 = vmul.f32 %v102, %v138
      %s140 = sld [smem:[#allocation4 + $0x2]]
      %v141 = vstv %s140
      %v142 = vadd.f32 %v139, %v141
      %v143 = vmax.f32 %v142, 0.0
      %144 = vst.msk [vmem:[#allocation8] sm:$0x1] %vm66, %v143
    $region17: #{tpu_custom_call.1} parent=1 // pred_fallthru
      _
    // Predicated region
    $region18: #{tpu_custom_call.1} parent=1 // pred_check
      _
    $region19: #{tpu_custom_call.1} parent=1 // pred_check_branch
      %146 = sbr.rel (0) target = $region21
    $region20: #{tpu_custom_call.1} parent=1 // pred_region
      %148 = vsyncadd [#allocation7], 0
      %s150 = sshll.u32 [#allocation8], 4
      %s151 = int_to_ptr.vmem [resolvable:$true] %s150
      %s152 = sshll.u32 %s3, 4
      %s153 = int_to_ptr.hbm [resolvable:$true] %s152
      %155 = dma.vmem_to_hbm [thread:$0]  %s151, 16, %s153, [#allocation7]
    $region21: #{tpu_custom_call.1} parent=1 // pred_fallthru
      _
    // Predicated region
    $region22: #{tpu_custom_call.1} parent=1 // pred_check
      _
    $region23: #{tpu_custom_call.1} parent=1 // pred_check_branch
      %157 = sbr.rel (0) target = $region25
    $region24: #{tpu_custom_call.1} parent=1 // pred_region
      %159 = dma.done [#allocation7], 16
    $region25: #{tpu_custom_call.1} parent=1 // pred_fallthru
      _
    %160 = vsyncpa [#allocation6], 1
    %161 = vsyncpa [#allocation7], 1

</llo_original>
